<compile_context>
chip_gen: v7x
topology: tpu7x:2x2x1
jax: 0.10.0
libtpu: 0.0.40
codegen_flags: <defaults>
</compile_context>

<pallas_src>
import math
import functools

import jax
import jax.numpy as jnp
from jax import lax
from jax.experimental import pallas as pl
from jax.experimental.pallas import tpu as pltpu


# ---------------------------------------------------------------------------
# Buffer setup — same formula as the PyTorch module __init__.
# ---------------------------------------------------------------------------
def make_positional_encoding(d_model: int, max_len: int = 5000,
                             dtype=jnp.float32) -> jnp.ndarray:
    position = jnp.arange(max_len, dtype=jnp.float32)[:, None]            # (L, 1)
    div_term = jnp.exp(jnp.arange(0, d_model, 2, dtype=jnp.float32)
                       * (-math.log(10000.0) / d_model))                  # (D/2,)
    pe = jnp.zeros((max_len, 1, d_model), dtype=jnp.float32)
    pe = pe.at[:, 0, 0::2].set(jnp.sin(position * div_term))
    pe = pe.at[:, 0, 1::2].set(jnp.cos(position * div_term))
    return pe.astype(dtype)


# ---------------------------------------------------------------------------
# Kernel: y = dropout(x + pe) on an (tile_s, B, D) block, SBD layout.
# ---------------------------------------------------------------------------
def _pos_enc_kernel(seed_ref, x_ref, pe_ref, o_ref, *, p: float, tile_s: int,
                    apply_dropout: bool):
    x = x_ref[...].astype(jnp.float32)       # (TS, B, D)
    pe = pe_ref[...].astype(jnp.float32)     # (TS, 1, D) -> broadcasts over batch
    y = x + pe

    if apply_dropout and p > 0.0:
        TS, B, D = y.shape
        seed = seed_ref[0].astype(jnp.uint32)
        row0 = (pl.program_id(0) * tile_s).astype(jnp.uint32)

        # Global element counter over the full (S, B, D) tensor -> mask is
        # independent of the tiling choice.
        s_idx = lax.broadcasted_iota(jnp.int32, y.shape, 0).astype(jnp.uint32) + row0
        b_idx = lax.broadcasted_iota(jnp.int32, y.shape, 1).astype(jnp.uint32)
        d_idx = lax.broadcasted_iota(jnp.int32, y.shape, 2).astype(jnp.uint32)
        ctr = (s_idx * jnp.uint32(B) + b_idx) * jnp.uint32(D) + d_idx

        # Cheap 4-op integer mixer (seed-mixed); good enough statistics for
        # dropout while keeping the training path HBM-bound on v6e/v7x.
        v = (ctr + seed) * jnp.uint32(0x9E3779B9)
        v = v ^ (v >> 16)
        v = v * jnp.uint32(0x7FEB352D)
        v = v ^ (v >> 15)

        # Drop iff hash < p * 2^31, compared in signed int31 space.
        r = (v >> 1).astype(jnp.int32)                       # uniform in [0, 2^31)
        threshold = jnp.int32(min(int(round(p * 2.0 ** 31)), 2 ** 31 - 1))
        keep = r >= threshold

        scale = jnp.float32(1.0 / (1.0 - p))                 # f32 scale (parity)
        y = jnp.where(keep, y * scale, jnp.zeros_like(y))

    o_ref[...] = y.astype(o_ref.dtype)


# ---------------------------------------------------------------------------
# Tiling helper: multiple-of-8 seq tile moving ~4 MiB of x per grid step.
# ---------------------------------------------------------------------------
def _choose_tile_s(S: int, row_bytes: int,
                   target_bytes: int = 4 * 1024 * 1024) -> int:
    t = (target_bytes // max(row_bytes, 1)) // 8 * 8
    t = max(8, t)
    t = min(t, ((S + 7) // 8) * 8)     # never larger than S rounded up to 8
    return int(t)


# ---------------------------------------------------------------------------
# Entry point: PyTorch layout (S, B, D), no transposes.
# ---------------------------------------------------------------------------
def positional_encoding_forward(x_sbd, pe, *, seed: int = 0, p: float = 0.1,
                                training: bool = True,
                                tile_s: int | None = None):
    """x_sbd: (S, B, D); pe: (max_len, 1, D) buffer. Returns dropout(x + pe[:S])."""
    S, B, D = x_sbd.shape
    max_len = pe.shape[0]
    assert S <= max_len and pe.shape[1] == 1 and pe.shape[2] == D

    if training and p >= 1.0:          # nn.Dropout(p=1) zeroes everything.
        return jnp.zeros_like(x_sbd)

    if tile_s is None:
        tile_s = _choose_tile_s(S, B * D * x_sbd.dtype.itemsize)
    grid = (pl.cdiv(S, tile_s),)       # partial last block handled by masking

    kernel = functools.partial(
        _pos_enc_kernel, p=float(p), tile_s=int(tile_s),
        apply_dropout=bool(training) and p > 0.0)

    return pl.pallas_call(
        kernel,
        out_shape=jax.ShapeDtypeStruct((S, B, D), x_sbd.dtype),
        grid_spec=pltpu.PrefetchScalarGridSpec(
            num_scalar_prefetch=1,     # dropout seed lives in SMEM
            grid=grid,
            in_specs=[
                pl.BlockSpec((tile_s, B, D), lambda i, seed_ref: (i, 0, 0)),
                pl.BlockSpec((tile_s, 1, D), lambda i, seed_ref: (i, 0, 0)),
            ],
            out_specs=pl.BlockSpec((tile_s, B, D), lambda i, seed_ref: (i, 0, 0)),
        ),
        compiler_params=pltpu.CompilerParams(
            dimension_semantics=("parallel",),   # independent seq tiles
            vmem_limit_bytes=40 * 1024 * 1024,   # ~4 MiB x-tiles, 2-deep, + pe
        ),
    )(jnp.asarray([seed], dtype=jnp.int32), x_sbd, pe)


# ---------------------------------------------------------------------------
# Demo / self-check
# ---------------------------------------------------------------------------
if __name__ == "__main__":
    key = jax.random.PRNGKey(0)

    seq_len, batch, d_model = 8, 2, 32
    max_len = 64
    dropout_p = 0.1

    x = jax.random.normal(key, (seq_len, batch, d_model), dtype=jnp.float32)
    pe = make_positional_encoding(d_model, max_len=max_len)
    ref = x + pe[:seq_len]

    # 1) eval-mode semantics: pure PE add, deterministic.
    y_eval = jax.block_until_ready(
        positional_encoding_forward(x, pe, seed=0, p=dropout_p, training=False))
    assert y_eval.shape == x.shape and y_eval.dtype == x.dtype
    assert jnp.allclose(y_eval, ref, atol=1e-6), "PE add mismatch"

    # 2) train-mode semantics: inverted dropout — every element is either 0
    #    (dropped) or (x + pe) / (1 - p) (kept).
    y_train = jax.block_until_ready(
        positional_encoding_forward(x, pe, seed=123, p=dropout_p, training=True))
    assert y_train.shape == x.shape and y_train.dtype == x.dtype
    dropped = (y_train == 0)
    kept_ok = jnp.abs(y_train * (1.0 - dropout_p) - ref) < 1e-5
    assert bool(jnp.all(dropped | kept_ok)), "dropout scaling mismatch"
    assert bool(jnp.any(dropped)), "dropout never dropped anything"
    assert bool(jnp.any(~dropped)), "dropout dropped everything"

    print("KERNEL_OK")
</pallas_src>

<mosaic_0001>
module attributes {stable_mosaic.version = 11 : i64} {
  func.func @_pos_enc_kernel(%arg0: i32, %arg1: memref<1xi32, #tpu.memory_space<smem>>, %arg2: memref<8x2x32xf32, #tpu.memory_space<vmem>>, %arg3: memref<8x1x32xf32, #tpu.memory_space<vmem>>, %arg4: memref<8x2x32xf32, #tpu.memory_space<vmem>>) attributes {dimension_semantics = [#tpu.dimension_semantics<parallel>], iteration_bounds = array<i64: 1>, scalar_prefetch = 1 : i64, scratch_operands = 0 : i64, tpu.core_type = #tpu.core_type<tc>, window_params = [{transform_indices = @transform_0, window_bounds = array<i64: 8, 2, 32>}, {transform_indices = @transform_1, window_bounds = array<i64: 8, 1, 32>}, {transform_indices = @transform_2, window_bounds = array<i64: 8, 2, 32>}]} {
    %c0 = arith.constant 0 : index
    %c0_0 = arith.constant 0 : index
    %c0_1 = arith.constant 0 : index
    %0 = vector.load %arg2[%c0, %c0_0, %c0_1] : memref<8x2x32xf32, #tpu.memory_space<vmem>>, vector<8x2x32xf32>
    %c0_2 = arith.constant 0 : index
    %c0_3 = arith.constant 0 : index
    %c0_4 = arith.constant 0 : index
    %1 = vector.load %arg3[%c0_2, %c0_3, %c0_4] : memref<8x1x32xf32, #tpu.memory_space<vmem>>, vector<8x1x32xf32>
    %2 = vector.broadcast %1 : vector<8x1x32xf32> to vector<8x2x32xf32>
    %3 = arith.addf %0, %2 : vector<8x2x32xf32>
    %c0_5 = arith.constant 0 : index
    %c0_6 = arith.constant 0 : index
    %c0_7 = arith.constant 0 : index
    %4 = vector.load %arg4[%c0_5, %c0_6, %c0_7] : memref<8x2x32xf32, #tpu.memory_space<vmem>>, vector<8x2x32xf32>
    tpu.vector_store %arg4[%c0_5, %c0_6, %c0_7], %3 {strides = array<i32>} : memref<8x2x32xf32, #tpu.memory_space<vmem>>, vector<8x2x32xf32>,
    return
  }
  func.func @transform_0(%arg0: i32, %arg1: memref<1xi32, #tpu.memory_space<smem>>) -> (i32, i32, i32) {
    %c0_i32 = arith.constant 0 : i32
    %c0_i32_0 = arith.constant 0 : i32
    %c0_i32_1 = arith.constant 0 : i32
    return %arg0, %c0_i32, %c0_i32_0 : i32, i32, i32
  }
  func.func @transform_1(%arg0: i32, %arg1: memref<1xi32, #tpu.memory_space<smem>>) -> (i32, i32, i32) {
    %c0_i32 = arith.constant 0 : i32
    %c0_i32_0 = arith.constant 0 : i32
    %c0_i32_1 = arith.constant 0 : i32
    return %arg0, %c0_i32, %c0_i32_0 : i32, i32, i32
  }
  func.func @transform_2(%arg0: i32, %arg1: memref<1xi32, #tpu.memory_space<smem>>) -> (i32, i32, i32) {
    %c0_i32 = arith.constant 0 : i32
    %c0_i32_0 = arith.constant 0 : i32
    %c0_i32_1 = arith.constant 0 : i32
    return %arg0, %c0_i32, %c0_i32_0 : i32, i32, i32
  }
}

</mosaic_0001>

<llo_original>
// kernel: tpu_custom_call.1
$region0: #{tpu_custom_call.1}
  #allocation0 [shape = 'u32[]', space=smem, size = 0x4, offset = 0x4, fixed_abs, tag = 'smem constant byte address 0x4 - core index']
  #allocation1 [shape = 'u32[144,128]{1,0:T(1,128)}', space=vmem, size = 0x12000, scoped, tag = 'internal scratch']
  #allocation2 [shape = 's32[1]{0}', space=sflag, size = 0x4, scoped, tag = 'scoped memory for tpu_custom_call.1']
  #allocation3 [shape = 's32[1]{0:T(128)S(6)}', space=smem, size = 0x200, scoped, tag = 'prefetched SMEM operand 0']
  %s0 = inlined_call_operand.<no memory space> [shape: s32[1], index: 0, kind: input, shape index: {}]
  %s1 = inlined_call_operand.vmem [shape: f32[8,2,32], index: 1, kind: input, shape index: {}]
  %s2 = inlined_call_operand.vmem [shape: f32[64,1,32], index: 2, kind: input, shape index: {}]
  %s3 = inlined_call_operand.hbm [shape: f32[8,2,32], index: 3, kind: output, shape index: {}]
  %s4 = sld [smem:[#allocation0]]
  $region18: #{tpu_custom_call.1} parent=0
    _
  %s6 = ssub.s32 1, %s4
  %s7 = scalar_select 0, %s6, %s4
  %8 = sst [smem:[#allocation3]] %s0
  $region1: #{tpu_custom_call.1} parent=0
    #allocation4 [shape = 'u8[8192]{0}', space=vmem, size = 0x2000, scoped, tag = 'output window, operand 0, single buffered']
    #allocation5 [shape = 's32[1]{0}', space=sflag, size = 0x4, scoped, tag = 'scoped memory for tpu_custom_call.1']
    %9 = vsyncpa [#allocation5], 0
    // Predicated region
    $region2: #{tpu_custom_call.1} parent=1 // pred_check
      _
    $region3: #{tpu_custom_call.1} parent=1 // pred_check_branch
      %11 = sbr.rel (0) target = $region5
    $region4: #{tpu_custom_call.1} parent=1 // pred_region
      _
    $region5: #{tpu_custom_call.1} parent=1 // pred_fallthru
      _
    // Predicated region
    $region6: #{tpu_custom_call.1} parent=1 // pred_check
      _
    $region7: #{tpu_custom_call.1} parent=1 // pred_check_branch
      %13 = sbr.rel (0) target = $region9
    $region8: #{tpu_custom_call.1} parent=1 // pred_region
      _
    $region9: #{tpu_custom_call.1} parent=1 // pred_fallthru
      _
    %v14 = vld [vmem:[%s1] sm:$0x3]
    %v15 = vld [vmem:[%s1 + $0x2] sm:$0x3]
    %v16 = vld [vmem:[%s1 + $0x4] sm:$0x3]
    %v17 = vld [vmem:[%s1 + $0x6] sm:$0x3]
    %v18 = vld [vmem:[%s1 + $0x8] sm:$0x3]
    %v19 = vld [vmem:[%s1 + $0xa] sm:$0x3]
    %v20 = vld [vmem:[%s1 + $0xc] sm:$0x3]
    %v21 = vld [vmem:[%s1 + $0xe] sm:$0x3]
    %v22 = vld [vmem:[%s2] sm:$0x1]
    %v23 = vld [vmem:[%s2 + $0x1] sm:$0x1]
    %v24 = vld [vmem:[%s2 + $0x2] sm:$0x1]
    %v25 = vld [vmem:[%s2 + $0x3] sm:$0x1]
    %v26 = vld [vmem:[%s2 + $0x4] sm:$0x1]
    %v27 = vld [vmem:[%s2 + $0x5] sm:$0x1]
    %v28 = vld [vmem:[%s2 + $0x6] sm:$0x1]
    %v29 = vld [vmem:[%s2 + $0x7] sm:$0x1]
    %v38 = vlaneseq
    %v39 = vshrl.u32 %v38, 7
    %v40 = vsub.s32 0, %v39
    %v41 = vrot.slane %v22, %v40
    %v42 = vlaneseq
    %v43 = vshrl.u32 %v42, 7
    %v44 = vsub.s32 0, %v43
    %v45 = vrot.slane %v23, %v44
    %v46 = vlaneseq
    %v47 = vshrl.u32 %v46, 7
    %v48 = vsub.s32 0, %v47
    %v49 = vrot.slane %v24, %v48
    %v50 = vlaneseq
    %v51 = vshrl.u32 %v50, 7
    %v52 = vsub.s32 0, %v51
    %v53 = vrot.slane %v25, %v52
    %v54 = vlaneseq
    %v55 = vshrl.u32 %v54, 7
    %v56 = vsub.s32 0, %v55
    %v57 = vrot.slane %v26, %v56
    %v58 = vlaneseq
    %v59 = vshrl.u32 %v58, 7
    %v60 = vsub.s32 0, %v59
    %v61 = vrot.slane %v27, %v60
    %v62 = vlaneseq
    %v63 = vshrl.u32 %v62, 7
    %v64 = vsub.s32 0, %v63
    %v65 = vrot.slane %v28, %v64
    %v66 = vlaneseq
    %v67 = vshrl.u32 %v66, 7
    %v68 = vsub.s32 0, %v67
    %v69 = vrot.slane %v29, %v68
    %v78 = vadd.f32 %v14, %v41
    %v79 = vadd.f32 %v15, %v45
    %v80 = vadd.f32 %v16, %v49
    %v81 = vadd.f32 %v17, %v53
    %v82 = vadd.f32 %v18, %v57
    %v83 = vadd.f32 %v19, %v61
    %v84 = vadd.f32 %v20, %v65
    %v85 = vadd.f32 %v21, %v69
    %vm86 = vcmask 254976
    %87 = vst.msk [vmem:[#allocation4] sm:$0x3] %vm86, %v78
    %88 = vst.msk [vmem:[#allocation4 + $0x2] sm:$0x3] %vm86, %v79
    %89 = vst.msk [vmem:[#allocation4 + $0x4] sm:$0x3] %vm86, %v80
    %90 = vst.msk [vmem:[#allocation4 + $0x6] sm:$0x3] %vm86, %v81
    %91 = vst.msk [vmem:[#allocation4 + $0x8] sm:$0x3] %vm86, %v82
    %92 = vst.msk [vmem:[#allocation4 + $0xa] sm:$0x3] %vm86, %v83
    %93 = vst.msk [vmem:[#allocation4 + $0xc] sm:$0x3] %vm86, %v84
    %94 = vst.msk [vmem:[#allocation4 + $0xe] sm:$0x3] %vm86, %v85
    // Predicated region
    $region10: #{tpu_custom_call.1} parent=1 // pred_check
      _
    $region11: #{tpu_custom_call.1} parent=1 // pred_check_branch
      %96 = sbr.rel (0) target = $region13
    $region12: #{tpu_custom_call.1} parent=1 // pred_region
      %s98 = ssub.s32 256, 256
      %99 = vsyncadd [#allocation5], %s98
      %s100 = sshll.u32 [#allocation4], 4
      %s101 = int_to_ptr.vmem [resolvable:$true] %s100
      %106 = dma.vmem_to_hbm [thread:$0]  %s101, 256, %s3, [#allocation5], 32, 32, 2
    $region13: #{tpu_custom_call.1} parent=1 // pred_fallthru
      _
    // Predicated region
    $region14: #{tpu_custom_call.1} parent=1 // pred_check
      _
    $region15: #{tpu_custom_call.1} parent=1 // pred_check_branch
      %108 = sbr.rel (0) target = $region17
    $region16: #{tpu_custom_call.1} parent=1 // pred_region
      %109 = dma.done [#allocation5], 256
    $region17: #{tpu_custom_call.1} parent=1 // pred_fallthru
      _
    %110 = vsyncpa [#allocation5], 1

</llo_original>
